<compile_context>
chip_gen: v6e
topology: v6e:2x2x1
jax: 0.10.0
libtpu: 0.0.40
codegen_flags: <defaults>
</compile_context>

<pallas_src>
import jax
import jax.numpy as jnp
from jax.experimental import pallas as pl
from jax.experimental.pallas import tpu as pltpu


def _gating_kernel(x_ref, w_ref, b_ref, out_ref):
    # x_ref: [TB, D] (f32 or bf16)   w_ref: [D, E] (same dtype, MXU [K,N] layout)
    # b_ref: [1, E] f32              out_ref: [TB, E] f32
    logits = jnp.dot(x_ref[...], w_ref[...], preferred_element_type=jnp.float32)
    logits = logits + b_ref[...]                     # broadcast bias over rows

    # Numerically-stable softmax over the experts axis, all in f32.
    m = jnp.max(logits, axis=-1, keepdims=True)
    e = jnp.exp(logits - m)
    denom = jnp.sum(e, axis=-1, keepdims=True)
    out_ref[...] = (e / denom).astype(out_ref.dtype)


def gating_network(x, weight, bias, *, block_batch=512, matmul_dtype=None):
    """Forward pass of GatingNetwork: softmax(x @ weight.T + bias, axis=-1).

    x:      [B, D]
    weight: [E, D]  (PyTorch nn.Linear layout; transposed once here)
    bias:   [E]
    matmul_dtype: dtype fed to the MXU (pass jnp.bfloat16 to halve HBM traffic
      on this bandwidth-bound kernel). Softmax math is always f32.
    returns [B, E] float32 softmax gate probabilities.
    """
    B, D = x.shape
    E = weight.shape[0]
    if matmul_dtype is None:
        matmul_dtype = x.dtype
    itemsize = jnp.dtype(matmul_dtype).itemsize

    # One-off tiny transpose to the MXU-native [K, N] layout (weight is small
    # relative to x, so this is ~free and avoids any in-kernel transpose).
    w_t = jnp.transpose(weight.astype(matmul_dtype))          # [D, E]
    x_c = x if x.dtype == matmul_dtype else x.astype(matmul_dtype)
    b2 = bias.astype(jnp.float32).reshape(1, E)

    # ---- Batch tile selection --------------------------------------------
    TB = min(block_batch, B)
    if TB != B:
        TB = max(8, (TB // 8) * 8)        # sublane-aligned batch tile
    elif B >= 16 and B % 16 == 0:
        TB = B // 2                       # give both v7x TensorCores work

    # Chip-aware VMEM budget (v7x has only 64 MiB per TensorCore).
    try:
        vmem_cap = pltpu.get_tpu_info().vmem_capacity_bytes
    except Exception:
        vmem_cap = 64 << 20               # conservative fallback (v7x)
    vmem_budget = vmem_cap - (8 << 20)

    def footprint(tb, const_bufs):
        xb = 2 * tb * D * itemsize                      # x tiles, double-buffered
        ob = 2 * tb * E * 4                             # f32 out tiles, double-buffered
        wb = const_bufs * (D * E * itemsize + E * 4)    # weight + bias
        return int(1.3 * (xb + ob + wb))                # ~30% Mosaic scratch headroom

    # Shrink the batch tile if large D would blow the VMEM budget (v7x).
    while TB >= 256 and footprint(TB, 2) > vmem_budget:
        TB //= 2

    num_tiles = pl.cdiv(B, TB)
    vmem_limit = int(min(max(footprint(TB, 2), 16 << 20), vmem_budget))

    cost = pl.CostEstimate(
        flops=2 * B * D * E,
        transcendentals=B * E,                                   # exp per logit
        bytes_accessed=itemsize * (B * D + D * E) + 4 * (E + B * E),
    )

    def build(single_buffer_consts):
        const_kw = (
            dict(pipeline_mode=pl.Buffered(1)) if single_buffer_consts else {}
        )
        return pl.pallas_call(
            _gating_kernel,
            out_shape=jax.ShapeDtypeStruct((B, E), jnp.float32),
            grid=(num_tiles,),
            in_specs=[
                pl.BlockSpec((TB, D), lambda i: (i, 0)),              # x: batch-tiled
                pl.BlockSpec((D, E), lambda i: (0, 0), **const_kw),   # weight: resident
                pl.BlockSpec((1, E), lambda i: (0, 0), **const_kw),   # bias: resident
            ],
            out_specs=pl.BlockSpec((TB, E), lambda i: (i, 0)),
            compiler_params=pltpu.CompilerParams(
                dimension_semantics=("parallel",),    # megacore split on v7x
                vmem_limit_bytes=vmem_limit,
            ),
            cost_estimate=cost,
        )

    try:
        # Grid-constant weight/bias only need one VMEM buffer (frees VMEM on v7x).
        return build(True)(x_c, w_t, b2)
    except Exception:
        # Fallback if this Pallas build rejects buffer_count=1.
        return build(False)(x_c, w_t, b2)


def _reference(x, weight, bias):
    logits = x @ weight.T + bias
    return jax.nn.softmax(logits, axis=-1)


if __name__ == "__main__":
    key = jax.random.PRNGKey(0)
    k_x, k_w, k_b, k_x2 = jax.random.split(key, 4)

    # Small shapes consistent with the module: 8 tokens, input_dim=32, 4 experts.
    batch, input_dim, num_experts = 8, 32, 4
    bound = 1.0 / (input_dim ** 0.5)
    x = jax.random.normal(k_x, (batch, input_dim), dtype=jnp.float32)
    weight = jax.random.uniform(
        k_w, (num_experts, input_dim), minval=-bound, maxval=bound, dtype=jnp.float32
    )
    bias = jax.random.uniform(
        k_b, (num_experts,), minval=-bound, maxval=bound, dtype=jnp.float32
    )

    ref = _reference(x, weight, bias)

    # 1) f32 path (matches the PyTorch module numerics).
    out = jax.block_until_ready(gating_network(x, weight, bias))
    assert out.shape == (batch, num_experts)
    assert jnp.allclose(out, ref, atol=1e-5, rtol=1e-5)
    assert jnp.allclose(jnp.sum(out, axis=-1), 1.0, atol=1e-5)

    # 2) bf16 matmul path (halves HBM traffic; softmax stays f32).
    out_bf16 = jax.block_until_ready(
        gating_network(x, weight, bias, matmul_dtype=jnp.bfloat16)
    )
    assert jnp.allclose(out_bf16, ref, atol=3e-2)
    assert jnp.allclose(jnp.sum(out_bf16, axis=-1), 1.0, atol=1e-3)

    # 3) Ragged final tile: no wrapper-side pad copy of x, Pallas masks the tail.
    batch2 = 40
    x2 = jax.random.normal(k_x2, (batch2, input_dim), dtype=jnp.float32)
    out2 = jax.block_until_ready(gating_network(x2, weight, bias, block_batch=16))
    assert out2.shape == (batch2, num_experts)
    assert jnp.allclose(out2, _reference(x2, weight, bias), atol=1e-5, rtol=1e-5)

    print("KERNEL_OK")
</pallas_src>

<mosaic_0001>
module attributes {stable_mosaic.version = 11 : i64} {
  func.func @_gating_kernel(%arg0: i32, %arg1: memref<8x32xf32, #tpu.memory_space<vmem>>, %arg2: memref<32x4xf32, #tpu.memory_space<vmem>>, %arg3: memref<1x4xf32, #tpu.memory_space<vmem>>, %arg4: memref<8x4xf32, #tpu.memory_space<vmem>>) attributes {dimension_semantics = [#tpu.dimension_semantics<parallel>], iteration_bounds = array<i64: 1>, scalar_prefetch = 0 : i64, scratch_operands = 0 : i64, tpu.core_type = #tpu.core_type<tc>, window_params = [{transform_indices = @transform_0, window_bounds = array<i64: 8, 32>}, {pipeline_mode = #tpu.pipeline_mode<synchronous>, transform_indices = @transform_1, window_bounds = array<i64: 32, 4>}, {pipeline_mode = #tpu.pipeline_mode<synchronous>, transform_indices = @transform_2, window_bounds = array<i64: 1, 4>}, {transform_indices = @transform_3, window_bounds = array<i64: 8, 4>}]} {
    %c0 = arith.constant 0 : index
    %c0_0 = arith.constant 0 : index
    %0 = vector.load %arg1[%c0, %c0_0] : memref<8x32xf32, #tpu.memory_space<vmem>>, vector<8x32xf32>
    %c0_1 = arith.constant 0 : index
    %c0_2 = arith.constant 0 : index
    %1 = vector.load %arg2[%c0_1, %c0_2] : memref<32x4xf32, #tpu.memory_space<vmem>>, vector<32x4xf32>
    %cst = arith.constant dense<0.000000e+00> : vector<8x4xf32>
    %2 = tpu.matmul %0, %1, %cst {dimension_numbers = #tpu.dot_dimension_numbers<[1], [0], [0], [1], [0, 0, 1, 1], [], []>} : vector<8x32xf32>, vector<32x4xf32>, vector<8x4xf32> -> vector<8x4xf32>
    %c0_3 = arith.constant 0 : index
    %c0_4 = arith.constant 0 : index
    %3 = vector.load %arg3[%c0_3, %c0_4] : memref<1x4xf32, #tpu.memory_space<vmem>>, vector<1x4xf32>
    %4 = vector.broadcast %3 : vector<1x4xf32> to vector<8x4xf32>
    %5 = arith.addf %2, %4 : vector<8x4xf32>
    %cst_5 = arith.constant dense<0xFF800000> : vector<8xf32>
    %6 = vector.multi_reduction <maximumf>, %5, %cst_5 [1] : vector<8x4xf32> to vector<8xf32>
    %7 = vector.shape_cast %6 : vector<8xf32> to vector<8x1xf32>
    %8 = vector.broadcast %7 : vector<8x1xf32> to vector<8x4xf32>
    %9 = arith.subf %5, %8 : vector<8x4xf32>
    %10 = math.exp %9 : vector<8x4xf32>
    %cst_6 = arith.constant dense<0.000000e+00> : vector<8xf32>
    %11 = vector.multi_reduction <add>, %10, %cst_6 [1] : vector<8x4xf32> to vector<8xf32>
    %12 = vector.shape_cast %11 : vector<8xf32> to vector<8x1xf32>
    %13 = vector.broadcast %12 : vector<8x1xf32> to vector<8x4xf32>
    %14 = arith.divf %10, %13 : vector<8x4xf32>
    %c0_7 = arith.constant 0 : index
    %c0_8 = arith.constant 0 : index
    %15 = vector.load %arg4[%c0_7, %c0_8] : memref<8x4xf32, #tpu.memory_space<vmem>>, vector<8x4xf32>
    tpu.vector_store %arg4[%c0_7, %c0_8], %14 {strides = array<i32>} : memref<8x4xf32, #tpu.memory_space<vmem>>, vector<8x4xf32>,
    return
  }
  func.func @transform_0(%arg0: i32) -> (i32, i32) {
    %c0_i32 = arith.constant 0 : i32
    %c0_i32_0 = arith.constant 0 : i32
    return %arg0, %c0_i32 : i32, i32
  }
  func.func @transform_1(%arg0: i32) -> (i32, i32) {
    %c0_i32 = arith.constant 0 : i32
    %c0_i32_0 = arith.constant 0 : i32
    %c0_i32_1 = arith.constant 0 : i32
    return %c0_i32, %c0_i32_0 : i32, i32
  }
  func.func @transform_2(%arg0: i32) -> (i32, i32) {
    %c0_i32 = arith.constant 0 : i32
    %c0_i32_0 = arith.constant 0 : i32
    %c0_i32_1 = arith.constant 0 : i32
    return %c0_i32, %c0_i32_0 : i32, i32
  }
  func.func @transform_3(%arg0: i32) -> (i32, i32) {
    %c0_i32 = arith.constant 0 : i32
    %c0_i32_0 = arith.constant 0 : i32
    return %arg0, %c0_i32 : i32, i32
  }
}

module attributes {stable_mosaic.version = 11 : i64} {
  func.func @_gating_kernel(%arg0: i32, %arg1: memref<8x32xf32, #tpu.memory_space<vmem>>, %arg2: memref<32x4xf32, #tpu.memory_space<vmem>>, %arg3: memref<1x4xf32, #tpu.memory_space<vmem>>, %arg4: memref<8x4xf32, #tpu.memory_space<vmem>>) attributes {dimension_semantics = [#tpu.dimension_semantics<parallel>], iteration_bounds = array<i64: 1>, scalar_prefetch = 0 : i64, scratch_operands = 0 : i64, tpu.core_type = #tpu.core_type<tc>, window_params = [{transform_indices = @transform_0, window_bounds = array<i64: 8, 32>}, {pipeline_mode = #tpu.pipeline_mode<synchronous>, transform_indices = @transform_1, window_bounds = array<i64: 32, 4>}, {pipeline_mode = #tpu.pipeline_mode<synchronous>, transform_indices = @transform_2, window_bounds = array<i64: 1, 4>}, {transform_indices = @transform_3, window_bounds = array<i64: 8, 4>}]} {
    %c0 = arith.constant 0 : index
    %c0_0 = arith.constant 0 : index
    %0 = vector.load %arg1[%c0, %c0_0] : memref<8x32xf32, #tpu.memory_space<vmem>>, vector<8x32xf32>
    %c0_1 = arith.constant 0 : index
    %c0_2 = arith.constant 0 : index
    %1 = vector.load %arg2[%c0_1, %c0_2] : memref<32x4xf32, #tpu.memory_space<vmem>>, vector<32x4xf32>
    %cst = arith.constant dense<0.000000e+00> : vector<8x4xf32>
    %2 = tpu.matmul %0, %1, %cst {dimension_numbers = #tpu.dot_dimension_numbers<[1], [0], [0], [1], [0, 0, 1, 1], [], []>} : vector<8x32xf32>, vector<32x4xf32>, vector<8x4xf32> -> vector<8x4xf32>
    %c0_3 = arith.constant 0 : index
    %c0_4 = arith.constant 0 : index
    %3 = vector.load %arg3[%c0_3, %c0_4] : memref<1x4xf32, #tpu.memory_space<vmem>>, vector<1x4xf32>
    %4 = vector.broadcast %3 : vector<1x4xf32> to vector<8x4xf32>
    %5 = arith.addf %2, %4 : vector<8x4xf32>
    %cst_5 = arith.constant dense<0xFF800000> : vector<8xf32>
    %6 = vector.multi_reduction <maximumf>, %5, %cst_5 [1] : vector<8x4xf32> to vector<8xf32>
    %7 = vector.shape_cast %6 : vector<8xf32> to vector<8x1xf32>
    %8 = vector.broadcast %7 : vector<8x1xf32> to vector<8x4xf32>
    %9 = arith.subf %5, %8 : vector<8x4xf32>
    %10 = math.exp %9 : vector<8x4xf32>
    %cst_6 = arith.constant dense<0.000000e+00> : vector<8xf32>
    %11 = vector.multi_reduction <add>, %10, %cst_6 [1] : vector<8x4xf32> to vector<8xf32>
    %12 = vector.shape_cast %11 : vector<8xf32> to vector<8x1xf32>
    %13 = vector.broadcast %12 : vector<8x1xf32> to vector<8x4xf32>
    %14 = arith.divf %10, %13 : vector<8x4xf32>
    %c0_7 = arith.constant 0 : index
    %c0_8 = arith.constant 0 : index
    %15 = vector.load %arg4[%c0_7, %c0_8] : memref<8x4xf32, #tpu.memory_space<vmem>>, vector<8x4xf32>
    tpu.vector_store %arg4[%c0_7, %c0_8], %14 {strides = array<i32>} : memref<8x4xf32, #tpu.memory_space<vmem>>, vector<8x4xf32>,
    return
  }
  func.func @transform_0(%arg0: i32) -> (i32, i32) {
    %c0_i32 = arith.constant 0 : i32
    %c0_i32_0 = arith.constant 0 : i32
    return %arg0, %c0_i32 : i32, i32
  }
  func.func @transform_1(%arg0: i32) -> (i32, i32) {
    %c0_i32 = arith.constant 0 : i32
    %c0_i32_0 = arith.constant 0 : i32
    %c0_i32_1 = arith.constant 0 : i32
    return %c0_i32, %c0_i32_0 : i32, i32
  }
  func.func @transform_2(%arg0: i32) -> (i32, i32) {
    %c0_i32 = arith.constant 0 : i32
    %c0_i32_0 = arith.constant 0 : i32
    %c0_i32_1 = arith.constant 0 : i32
    return %c0_i32, %c0_i32_0 : i32, i32
  }
  func.func @transform_3(%arg0: i32) -> (i32, i32) {
    %c0_i32 = arith.constant 0 : i32
    %c0_i32_0 = arith.constant 0 : i32
    return %arg0, %c0_i32 : i32, i32
  }
}

</mosaic_0001>

<llo_original>
// kernel: tpu_custom_call.1
$region0: #{tpu_custom_call.1}
  #allocation0 [shape = 'u32[]', space=smem, size = 0x4, offset = 0x4, fixed_abs, tag = 'smem constant byte address 0x4 - core index']
  #allocation1 [shape = 'u32[144,128]{1,0:T(1,128)}', space=vmem, size = 0x12000, scoped, tag = 'internal scratch']
  %s0 = inlined_call_operand.vmem [shape: f32[8,32], index: 0, kind: input, shape index: {}]
  %s1 = inlined_call_operand.vmem [shape: f32[32,4], index: 1, kind: input, shape index: {}]
  %s2 = inlined_call_operand.vmem [shape: f32[1,4], index: 2, kind: input, shape index: {}]
  %s3 = inlined_call_operand.vmem [shape: f32[8,4], index: 3, kind: output, shape index: {}]
  %s4 = sld [smem:[#allocation0]]
  $region22: #{tpu_custom_call.1} parent=0
    _
  %s6 = ssub.s32 1, %s4
  %s7 = scalar_select 0, %s6, %s4
  // Predicated region
  $region2: #{tpu_custom_call.1} parent=0 // pred_check
    _
  $region3: #{tpu_custom_call.1} parent=0 // pred_check_branch
    %9 = sbr.rel (0) target = $region5
  $region4: #{tpu_custom_call.1} parent=0 // pred_region
    _
  $region5: #{tpu_custom_call.1} parent=0 // pred_fallthru
    _
  // Predicated region
  $region6: #{tpu_custom_call.1} parent=0 // pred_check
    _
  $region7: #{tpu_custom_call.1} parent=0 // pred_check_branch
    %11 = sbr.rel (0) target = $region9
  $region8: #{tpu_custom_call.1} parent=0 // pred_region
    _
  $region9: #{tpu_custom_call.1} parent=0 // pred_fallthru
    _
  // Predicated region
  $region10: #{tpu_custom_call.1} parent=0 // pred_check
    _
  $region11: #{tpu_custom_call.1} parent=0 // pred_check_branch
    %13 = sbr.rel (0) target = $region13
  $region12: #{tpu_custom_call.1} parent=0 // pred_region
    _
  $region13: #{tpu_custom_call.1} parent=0 // pred_fallthru
    _
  %v14 = vld [vmem:[%s0] sm:$0xff]
  %v15 = vld [vmem:[%s1] sm:$0xff]
  %v16 = vld [vmem:[%s1 + $0x8] sm:$0xff]
  %v17 = vld [vmem:[%s1 + $0x10] sm:$0xff]
  %v18 = vld [vmem:[%s1 + $0x18] sm:$0xff]
  %v19 = vld [vmem:[%s2] sm:$0x1]
  %v21 = vlaneseq
  %v22 = vshrl.u32 %v21, 7
  %v23 = vsub.s32 0, %v22
  %v24 = vrot.slane %v19, %v23
  %vm26 = vcmask 261120
  %v28 = vsel %vm26, %v14, 0
  %30 = vmatprep.subr.mxu0 0.0
  %31 = vmatpush1.msra.mxu0 0.0
  %32 = vmatprep.subr.mxu0 0.0
  %33 = vmatpush1.msra.mxu0 0.0
  %34 = vmatprep.subr.mxu0 0.0
  %35 = vmatpush1.msra.mxu0 0.0
  %36 = vmatprep.subr.mxu0 0.0
  %37 = vmatpush1.msra.mxu0 0.0
  %38 = vmatprep.subr.mxu0 0.0
  %39 = vmatpush1.msra.mxu0 0.0
  %40 = vmatprep.subr.mxu0 0.0
  %41 = vmatpush1.msra.mxu0 0.0
  %42 = vmatprep.subr.mxu0 0.0
  %43 = vmatpush1.msra.mxu0 0.0
  %44 = vmatprep.subr.mxu0 0.0
  %45 = vmatpush1.msra.mxu0 0.0
  %46 = vmatprep.subr.mxu0 0.0
  %47 = vmatpush1.msra.mxu0 0.0
  %48 = vmatprep.subr.mxu0 0.0
  %49 = vmatpush1.msra.mxu0 0.0
  %50 = vmatprep.subr.mxu0 0.0
  %51 = vmatpush1.msra.mxu0 0.0
  %52 = vmatprep.subr.mxu0 0.0
  %53 = vmatpush1.msra.mxu0 0.0
  %54 = vmatprep.subr.mxu0 0.0
  %55 = vmatpush1.msra.mxu0 %v18
  %56 = vmatprep.subr.mxu0 0.0
  %57 = vmatpush1.msra.mxu0 %v17
  %58 = vmatprep.subr.mxu0 0.0
  %59 = vmatpush1.msra.mxu0 %v16
  %60 = vmatprep.subr.mxu0 0.0
  %61 = vmatpush1.msra.mxu0 %v15
  %62 = vmatprep.subr.mxu0 0.0
  %63 = vmatpush2.msra.mxu0 0.0
  %64 = vmatprep.subr.mxu0 0.0
  %65 = vmatpush2.msra.mxu0 0.0
  %66 = vmatprep.subr.mxu0 0.0
  %67 = vmatpush2.msra.mxu0 0.0
  %68 = vmatprep.subr.mxu0 0.0
  %69 = vmatpush2.msra.mxu0 0.0
  %70 = vmatprep.subr.mxu0 0.0
  %71 = vmatpush2.msra.mxu0 0.0
  %72 = vmatprep.subr.mxu0 0.0
  %73 = vmatpush2.msra.mxu0 0.0
  %74 = vmatprep.subr.mxu0 0.0
  %75 = vmatpush2.msra.mxu0 0.0
  %76 = vmatprep.subr.mxu0 0.0
  %77 = vmatpush2.msra.mxu0 0.0
  %78 = vmatprep.subr.mxu0 0.0
  %79 = vmatpush2.msra.mxu0 0.0
  %80 = vmatprep.subr.mxu0 0.0
  %81 = vmatpush2.msra.mxu0 0.0
  %82 = vmatprep.subr.mxu0 0.0
  %83 = vmatpush2.msra.mxu0 0.0
  %84 = vmatprep.subr.mxu0 0.0
  %85 = vmatpush2.msra.mxu0 0.0
  %86 = vmatprep.subr.mxu0 0.0
  %87 = vmatpush2.msra.mxu0 0.0
  %88 = vmatprep.subr.mxu0 0.0
  %89 = vmatpush2.msra.mxu0 0.0
  %90 = vmatprep.subr.mxu0 0.0
  %91 = vmatpush2.msra.mxu0 0.0
  %92 = vmatprep.subr.mxu0 0.0
  %93 = vmatpush2.msra.mxu0 0.0
  %94 = vmatprep.mubr.f32.mxu0 0.0
  %95 = vmatmul.mubr.f32.gmra.mxu0 %v28
  %v96 = vpop.f32.mrf.mxu0
  %v97 = vadd.f32 %v24, %v96
  %v98 = vpop.f32.mrf.mxu0
  %99 = vdwg.mxu0
  %vm100 = vcmask 31744
  %v101 = vsel %vm100, %v97, -inf
  %102 = vmax.xlane.f32.xlu0 %v101
  %v103 = vpop.xlane.xlu0 %102
  %v104 = vsub.f32 %v97, %v103
  %v105 = vmul.f32 %v104, 1.442695
  %v106 = vpow.pop %v105
  %v107 = vsel %vm100, %v106, 0.0
  %108 = vadd.xlane.f32.xlu0 %v107
  %v109 = vpop.xlane.xlu0 %108
  %v110 = vrcp.pop %v109
  %v111 = vmul.f32 %v106, %v110
  %112 = vst.msk [vmem:[%s3] sm:$0xff] %vm100, %v111
  // Predicated region
  $region14: #{tpu_custom_call.1} parent=0 // pred_check
    _
  $region15: #{tpu_custom_call.1} parent=0 // pred_check_branch
    %114 = sbr.rel (0) target = $region17
  $region16: #{tpu_custom_call.1} parent=0 // pred_region
    _
  $region17: #{tpu_custom_call.1} parent=0 // pred_fallthru
    _
  // Predicated region
  $region18: #{tpu_custom_call.1} parent=0 // pred_check
    _
  $region19: #{tpu_custom_call.1} parent=0 // pred_check_branch
    %116 = sbr.rel (0) target = $region21
  $region20: #{tpu_custom_call.1} parent=0 // pred_region
    _
  $region21: #{tpu_custom_call.1} parent=0 // pred_fallthru
    _

// kernel: tpu_custom_call.1
$region0: #{tpu_custom_call.1}
  #allocation0 [shape = 'u32[]', space=smem, size = 0x4, offset = 0x4, fixed_abs, tag = 'smem constant byte address 0x4 - core index']
  #allocation1 [shape = 'u32[144,128]{1,0:T(1,128)}', space=vmem, size = 0x12000, scoped, tag = 'internal scratch']
  %s0 = inlined_call_operand.vmem [shape: f32[8,32], index: 0, kind: input, shape index: {}]
  %s1 = inlined_call_operand.vmem [shape: f32[32,4], index: 1, kind: input, shape index: {}]
  %s2 = inlined_call_operand.vmem [shape: f32[1,4], index: 2, kind: input, shape index: {}]
  %s3 = inlined_call_operand.vmem [shape: f32[8,4], index: 3, kind: output, shape index: {}]
  %s4 = sld [smem:[#allocation0]]
  $region22: #{tpu_custom_call.1} parent=0
    _
  %s6 = ssub.s32 1, %s4
  %s7 = scalar_select 0, %s6, %s4
  // Predicated region
  $region2: #{tpu_custom_call.1} parent=0 // pred_check
    _
  $region3: #{tpu_custom_call.1} parent=0 // pred_check_branch
    %9 = sbr.rel (0) target = $region5
  $region4: #{tpu_custom_call.1} parent=0 // pred_region
    _
  $region5: #{tpu_custom_call.1} parent=0 // pred_fallthru
    _
  // Predicated region
  $region6: #{tpu_custom_call.1} parent=0 // pred_check
    _
  $region7: #{tpu_custom_call.1} parent=0 // pred_check_branch
    %11 = sbr.rel (0) target = $region9
  $region8: #{tpu_custom_call.1} parent=0 // pred_region
    _
  $region9: #{tpu_custom_call.1} parent=0 // pred_fallthru
    _
  // Predicated region
  $region10: #{tpu_custom_call.1} parent=0 // pred_check
    _
  $region11: #{tpu_custom_call.1} parent=0 // pred_check_branch
    %13 = sbr.rel (0) target = $region13
  $region12: #{tpu_custom_call.1} parent=0 // pred_region
    _
  $region13: #{tpu_custom_call.1} parent=0 // pred_fallthru
    _
  %v14 = vld [vmem:[%s0] sm:$0xff]
  %v15 = vld [vmem:[%s1] sm:$0xff]
  %v16 = vld [vmem:[%s1 + $0x8] sm:$0xff]
  %v17 = vld [vmem:[%s1 + $0x10] sm:$0xff]
  %v18 = vld [vmem:[%s1 + $0x18] sm:$0xff]
  %v19 = vld [vmem:[%s2] sm:$0x1]
  %v21 = vlaneseq
  %v22 = vshrl.u32 %v21, 7
  %v23 = vsub.s32 0, %v22
  %v24 = vrot.slane %v19, %v23
  %vm26 = vcmask 261120
  %v28 = vsel %vm26, %v14, 0
  %30 = vmatprep.subr.mxu0 0.0
  %31 = vmatpush1.msra.mxu0 0.0
  %32 = vmatprep.subr.mxu0 0.0
  %33 = vmatpush1.msra.mxu0 0.0
  %34 = vmatprep.subr.mxu0 0.0
  %35 = vmatpush1.msra.mxu0 0.0
  %36 = vmatprep.subr.mxu0 0.0
  %37 = vmatpush1.msra.mxu0 0.0
  %38 = vmatprep.subr.mxu0 0.0
  %39 = vmatpush1.msra.mxu0 0.0
  %40 = vmatprep.subr.mxu0 0.0
  %41 = vmatpush1.msra.mxu0 0.0
  %42 = vmatprep.subr.mxu0 0.0
  %43 = vmatpush1.msra.mxu0 0.0
  %44 = vmatprep.subr.mxu0 0.0
  %45 = vmatpush1.msra.mxu0 0.0
  %46 = vmatprep.subr.mxu0 0.0
  %47 = vmatpush1.msra.mxu0 0.0
  %48 = vmatprep.subr.mxu0 0.0
  %49 = vmatpush1.msra.mxu0 0.0
  %50 = vmatprep.subr.mxu0 0.0
  %51 = vmatpush1.msra.mxu0 0.0
  %52 = vmatprep.subr.mxu0 0.0
  %53 = vmatpush1.msra.mxu0 0.0
  %54 = vmatprep.subr.mxu0 0.0
  %55 = vmatpush1.msra.mxu0 %v18
  %56 = vmatprep.subr.mxu0 0.0
  %57 = vmatpush1.msra.mxu0 %v17
  %58 = vmatprep.subr.mxu0 0.0
  %59 = vmatpush1.msra.mxu0 %v16
  %60 = vmatprep.subr.mxu0 0.0
  %61 = vmatpush1.msra.mxu0 %v15
  %62 = vmatprep.subr.mxu0 0.0
  %63 = vmatpush2.msra.mxu0 0.0
  %64 = vmatprep.subr.mxu0 0.0
  %65 = vmatpush2.msra.mxu0 0.0
  %66 = vmatprep.subr.mxu0 0.0
  %67 = vmatpush2.msra.mxu0 0.0
  %68 = vmatprep.subr.mxu0 0.0
  %69 = vmatpush2.msra.mxu0 0.0
  %70 = vmatprep.subr.mxu0 0.0
  %71 = vmatpush2.msra.mxu0 0.0
  %72 = vmatprep.subr.mxu0 0.0
  %73 = vmatpush2.msra.mxu0 0.0
  %74 = vmatprep.subr.mxu0 0.0
  %75 = vmatpush2.msra.mxu0 0.0
  %76 = vmatprep.subr.mxu0 0.0
  %77 = vmatpush2.msra.mxu0 0.0
  %78 = vmatprep.subr.mxu0 0.0
  %79 = vmatpush2.msra.mxu0 0.0
  %80 = vmatprep.subr.mxu0 0.0
  %81 = vmatpush2.msra.mxu0 0.0
  %82 = vmatprep.subr.mxu0 0.0
  %83 = vmatpush2.msra.mxu0 0.0
  %84 = vmatprep.subr.mxu0 0.0
  %85 = vmatpush2.msra.mxu0 0.0
  %86 = vmatprep.subr.mxu0 0.0
  %87 = vmatpush2.msra.mxu0 0.0
  %88 = vmatprep.subr.mxu0 0.0
  %89 = vmatpush2.msra.mxu0 0.0
  %90 = vmatprep.subr.mxu0 0.0
  %91 = vmatpush2.msra.mxu0 0.0
  %92 = vmatprep.subr.mxu0 0.0
  %93 = vmatpush2.msra.mxu0 0.0
  %94 = vmatprep.mubr.f32.mxu0 0.0
  %95 = vmatmul.mubr.f32.gmra.mxu0 %v28
  %v96 = vpop.f32.mrf.mxu0
  %v97 = vadd.f32 %v24, %v96
  %v98 = vpop.f32.mrf.mxu0
  %99 = vdwg.mxu0
  %vm100 = vcmask 31744
  %v101 = vsel %vm100, %v97, -inf
  %102 = vmax.xlane.f32.xlu0 %v101
  %v103 = vpop.xlane.xlu0 %102
  %v104 = vsub.f32 %v97, %v103
  %v105 = vmul.f32 %v104, 1.442695
  %v106 = vpow.pop %v105
  %v107 = vsel %vm100, %v106, 0.0
  %108 = vadd.xlane.f32.xlu0 %v107
  %v109 = vpop.xlane.xlu0 %108
  %v110 = vrcp.pop %v109
  %v111 = vmul.f32 %v106, %v110
  %112 = vst.msk [vmem:[%s3] sm:$0xff] %vm100, %v111
  // Predicated region
  $region14: #{tpu_custom_call.1} parent=0 // pred_check
    _
  $region15: #{tpu_custom_call.1} parent=0 // pred_check_branch
    %114 = sbr.rel (0) target = $region17
  $region16: #{tpu_custom_call.1} parent=0 // pred_region
    _
  $region17: #{tpu_custom_call.1} parent=0 // pred_fallthru
    _
  // Predicated region
  $region18: #{tpu_custom_call.1} parent=0 // pred_check
    _
  $region19: #{tpu_custom_call.1} parent=0 // pred_check_branch
    %116 = sbr.rel (0) target = $region21
  $region20: #{tpu_custom_call.1} parent=0 // pred_region
    _
  $region21: #{tpu_custom_call.1} parent=0 // pred_fallthru
    _

</llo_original>
